<compile_context>
chip_gen: v6e
topology: v6e:2x2x1
jax: 0.10.0
libtpu: 0.0.40
codegen_flags: <defaults>
</compile_context>

<pallas_src>
import functools

import jax
import jax.numpy as jnp
from jax import lax
from jax.experimental import pallas as pl
from jax.experimental.pallas import tpu as pltpu

MARGIN = 0.3  # args.margin in the reference module
EPS = 1e-8    # torch cosine_similarity eps


def _ranking_loss_kernel(x1_ref, x2_ref, y_ref, out_ref, *, margin, total_rows,
                         block_rows):
    i = pl.program_id(0)

    x1 = x1_ref[...].astype(jnp.float32)          # (TB, D)
    x2 = x2_ref[...].astype(jnp.float32)          # (TB, D)
    y = y_ref[...]                                # (TB, 1) int32 (+1 / -1)

    # Per-row reductions along the lane axis (XLU).
    dot = jnp.sum(x1 * x2, axis=-1, keepdims=True)   # (TB, 1)
    s1 = jnp.sum(x1 * x1, axis=-1, keepdims=True)    # (TB, 1)
    s2 = jnp.sum(x2 * x2, axis=-1, keepdims=True)    # (TB, 1)

    # cos = dot / max(||x1||*||x2||, eps), computed with a single EUP rsqrt.
    inv = lax.rsqrt(jnp.maximum(s1 * s2, jnp.float32(EPS * EPS)))
    cos = dot * inv                                  # (TB, 1)

    pos_loss = 1.0 - cos
    neg_loss = jnp.maximum(cos - jnp.float32(margin), 0.0)
    per_row = jnp.where(y > 0, pos_loss, neg_loss)   # (TB, 1)

    # Zero out padded rows of a partial last tile (mean uses true B outside).
    row = i * block_rows + lax.broadcasted_iota(jnp.int32, per_row.shape, 0)
    per_row = jnp.where(row < total_rows, per_row, 0.0)

    out_ref[...] = per_row.astype(out_ref.dtype)


def ranking_loss(x_question, x_path, target, *, margin=MARGIN, block_rows=None):
    """x_question, x_path: (B, D) float (f32 or bf16); target: (B,) +1 / -1."""
    B, D = x_question.shape

    if block_rows is None:
        if B <= 8:
            block_rows = B
        else:
            # 2 inputs x 2 double-buffers x TB x D x 4B  <=  ~16 MiB
            budget_rows = max(8, (1 << 20) // max(D, 1))
            block_rows = min(B, budget_rows, 512)
            block_rows = max(8, (block_rows // 8) * 8)

    num_tiles = pl.cdiv(B, block_rows)
    y = target.astype(jnp.int32).reshape(B, 1)

    kernel = functools.partial(
        _ranking_loss_kernel,
        margin=float(margin),
        total_rows=B,
        block_rows=block_rows,
    )

    per_row = pl.pallas_call(
        kernel,
        out_shape=jax.ShapeDtypeStruct((B, 1), jnp.float32),
        grid_spec=pltpu.PrefetchScalarGridSpec(
            num_scalar_prefetch=0,
            grid=(num_tiles,),
            in_specs=[
                pl.BlockSpec((block_rows, D), lambda i: (i, 0)),
                pl.BlockSpec((block_rows, D), lambda i: (i, 0)),
                pl.BlockSpec((block_rows, 1), lambda i: (i, 0)),
            ],
            out_specs=pl.BlockSpec((block_rows, 1), lambda i: (i, 0)),
        ),
        compiler_params=pltpu.CompilerParams(
            dimension_semantics=("parallel",),       # shards across TCs on v7x
            vmem_limit_bytes=32 * 1024 * 1024,       # safe on v5e/v6e/v7x
        ),
    )(x_question, x_path, y)

    return jnp.sum(per_row) / jnp.float32(B)


def ranking_loss_ref(x1, x2, y, margin=MARGIN):
    # Pure-JAX reference for sanity checking.
    x1 = x1.astype(jnp.float32)
    x2 = x2.astype(jnp.float32)
    dot = jnp.sum(x1 * x2, axis=-1)
    denom = jnp.maximum(
        jnp.linalg.norm(x1, axis=-1) * jnp.linalg.norm(x2, axis=-1), EPS)
    cos = dot / denom
    per = jnp.where(y > 0, 1.0 - cos, jnp.maximum(cos - margin, 0.0))
    return jnp.mean(per)


if __name__ == "__main__":
    key = jax.random.PRNGKey(0)
    k1, k2, k3 = jax.random.split(key, 3)

    B, D = 32, 64
    # output[QUESTION] and output[PATH] embeddings
    x_question = jax.random.normal(k1, (B, D), dtype=jnp.float32)
    x_path = jax.random.normal(k2, (B, D), dtype=jnp.float32)
    # target in {+1, -1}
    target = jnp.where(jax.random.bernoulli(k3, 0.5, (B,)), 1, -1).astype(jnp.int32)

    ref = ranking_loss_ref(x_question, x_path, target)

    # Multi-tile path (4 grid steps of 8 rows).
    loss = ranking_loss(x_question, x_path, target, block_rows=8)
    jax.block_until_ready(loss)
    assert jnp.allclose(loss, ref, atol=1e-5, rtol=1e-5), (loss, ref)

    # Auto tile-size path.
    loss_auto = ranking_loss(x_question, x_path, target)
    jax.block_until_ready(loss_auto)
    assert jnp.allclose(loss_auto, ref, atol=1e-5, rtol=1e-5), (loss_auto, ref)

    print("KERNEL_OK")
</pallas_src>

<mosaic_0001>
module attributes {stable_mosaic.version = 11 : i64} {
  func.func @_ranking_loss_kernel(%arg0: i32, %arg1: memref<8x64xf32, #tpu.memory_space<vmem>>, %arg2: memref<8x64xf32, #tpu.memory_space<vmem>>, %arg3: memref<8x1xi32, #tpu.memory_space<vmem>>, %arg4: memref<8x1xf32, #tpu.memory_space<vmem>>) attributes {dimension_semantics = [#tpu.dimension_semantics<parallel>], iteration_bounds = array<i64: 4>, scalar_prefetch = 0 : i64, scratch_operands = 0 : i64, tpu.core_type = #tpu.core_type<tc>, window_params = [{transform_indices = @transform_0, window_bounds = array<i64: 8, 64>}, {transform_indices = @transform_1, window_bounds = array<i64: 8, 64>}, {transform_indices = @transform_2, window_bounds = array<i64: 8, 1>}, {transform_indices = @transform_3, window_bounds = array<i64: 8, 1>}]} {
    %c0 = arith.constant 0 : index
    %c0_0 = arith.constant 0 : index
    %0 = vector.load %arg1[%c0, %c0_0] : memref<8x64xf32, #tpu.memory_space<vmem>>, vector<8x64xf32>
    %c0_1 = arith.constant 0 : index
    %c0_2 = arith.constant 0 : index
    %1 = vector.load %arg2[%c0_1, %c0_2] : memref<8x64xf32, #tpu.memory_space<vmem>>, vector<8x64xf32>
    %c0_3 = arith.constant 0 : index
    %c0_4 = arith.constant 0 : index
    %2 = vector.load %arg3[%c0_3, %c0_4] : memref<8x1xi32, #tpu.memory_space<vmem>>, vector<8x1xi32>
    %3 = arith.mulf %0, %1 : vector<8x64xf32>
    %cst = arith.constant dense<0.000000e+00> : vector<8xf32>
    %4 = vector.multi_reduction <add>, %3, %cst [1] : vector<8x64xf32> to vector<8xf32>
    %5 = vector.shape_cast %4 : vector<8xf32> to vector<8x1xf32>
    %6 = arith.mulf %0, %0 : vector<8x64xf32>
    %cst_5 = arith.constant dense<0.000000e+00> : vector<8xf32>
    %7 = vector.multi_reduction <add>, %6, %cst_5 [1] : vector<8x64xf32> to vector<8xf32>
    %8 = vector.shape_cast %7 : vector<8xf32> to vector<8x1xf32>
    %9 = arith.mulf %1, %1 : vector<8x64xf32>
    %cst_6 = arith.constant dense<0.000000e+00> : vector<8xf32>
    %10 = vector.multi_reduction <add>, %9, %cst_6 [1] : vector<8x64xf32> to vector<8xf32>
    %11 = vector.shape_cast %10 : vector<8xf32> to vector<8x1xf32>
    %12 = arith.mulf %8, %11 : vector<8x1xf32>
    %cst_7 = arith.constant 1.000000e-16 : f32
    %13 = vector.broadcast %cst_7 : f32 to vector<8x1xf32>
    %14 = arith.maximumf %12, %13 : vector<8x1xf32>
    %15 = math.rsqrt %14 : vector<8x1xf32>
    %16 = arith.mulf %5, %15 : vector<8x1xf32>
    %cst_8 = arith.constant 1.000000e+00 : f32
    %17 = vector.broadcast %cst_8 : f32 to vector<8x1xf32>
    %18 = arith.subf %17, %16 : vector<8x1xf32>
    %cst_9 = arith.constant 3.000000e-01 : f32
    %19 = vector.broadcast %cst_9 : f32 to vector<8x1xf32>
    %20 = arith.subf %16, %19 : vector<8x1xf32>
    %cst_10 = arith.constant 0.000000e+00 : f32
    %21 = vector.broadcast %cst_10 : f32 to vector<8x1xf32>
    %22 = arith.maximumf %20, %21 : vector<8x1xf32>
    %c0_i32 = arith.constant 0 : i32
    %23 = vector.broadcast %c0_i32 : i32 to vector<8x1xi32>
    %24 = arith.cmpi sgt, %2, %23 : vector<8x1xi32>
    %25 = arith.select %24, %18, %22 : vector<8x1xi1>, vector<8x1xf32>
    %c8_i32 = arith.constant 8 : i32
    %26 = arith.muli %arg0, %c8_i32 : i32
    %27 = tpu.iota {dimensions = array<i32: 0>} : vector<8x1xi32>
    %28 = vector.broadcast %26 : i32 to vector<8x1xi32>
    %29 = arith.addi %28, %27 : vector<8x1xi32>
    %c32_i32 = arith.constant 32 : i32
    %30 = vector.broadcast %c32_i32 : i32 to vector<8x1xi32>
    %31 = arith.cmpi slt, %29, %30 : vector<8x1xi32>
    %cst_11 = arith.constant 0.000000e+00 : f32
    %32 = vector.broadcast %cst_11 : f32 to vector<8x1xf32>
    %33 = arith.select %31, %25, %32 : vector<8x1xi1>, vector<8x1xf32>
    %c0_12 = arith.constant 0 : index
    %c0_13 = arith.constant 0 : index
    %34 = vector.load %arg4[%c0_12, %c0_13] : memref<8x1xf32, #tpu.memory_space<vmem>>, vector<8x1xf32>
    tpu.vector_store %arg4[%c0_12, %c0_13], %33 {strides = array<i32>} : memref<8x1xf32, #tpu.memory_space<vmem>>, vector<8x1xf32>,
    return
  }
  func.func @transform_0(%arg0: i32) -> (i32, i32) {
    %c0_i32 = arith.constant 0 : i32
    %c0_i32_0 = arith.constant 0 : i32
    return %arg0, %c0_i32 : i32, i32
  }
  func.func @transform_1(%arg0: i32) -> (i32, i32) {
    %c0_i32 = arith.constant 0 : i32
    %c0_i32_0 = arith.constant 0 : i32
    return %arg0, %c0_i32 : i32, i32
  }
  func.func @transform_2(%arg0: i32) -> (i32, i32) {
    %c0_i32 = arith.constant 0 : i32
    %c0_i32_0 = arith.constant 0 : i32
    return %arg0, %c0_i32 : i32, i32
  }
  func.func @transform_3(%arg0: i32) -> (i32, i32) {
    %c0_i32 = arith.constant 0 : i32
    %c0_i32_0 = arith.constant 0 : i32
    return %arg0, %c0_i32 : i32, i32
  }
}

</mosaic_0001>

<llo_original>
// kernel: tpu_custom_call.1
$region0: #{tpu_custom_call.1}
  #allocation0 [shape = 'u32[]', space=smem, size = 0x4, offset = 0x4, fixed_abs, tag = 'smem constant byte address 0x4 - core index']
  #allocation1 [shape = 'u32[144,128]{1,0:T(1,128)}', space=vmem, size = 0x12000, scoped, tag = 'internal scratch']
  %s0 = inlined_call_operand.vmem [shape: f32[32,64], index: 0, kind: input, shape index: {}]
  %s1 = inlined_call_operand.hbm [shape: f32[32,64], index: 1, kind: input, shape index: {}]
  %s2 = inlined_call_operand.vmem [shape: s32[32,1], index: 2, kind: input, shape index: {}]
  %s3 = inlined_call_operand.vmem [shape: f32[32,1], index: 3, kind: output, shape index: {}]
  %s4 = sld [smem:[#allocation0]]
  $region49: #{tpu_custom_call.1} parent=0
    _
  %s6 = ssub.s32 1, %s4
  %s7 = scalar_select 0, %s6, %s4
  $region1: #{tpu_custom_call.1} parent=0
    #allocation2 [shape = 'u8[8192]{0}', space=vmem, size = 0x2000, scoped, tag = 'input window, operand 1']
    #allocation3 [shape = 's32[2]{0}', space=sflag, size = 0x8, scoped, tag = 'scoped memory for tpu_custom_call.1']
    %8 = vsyncpa [#allocation3], 0
    %s9 = scalar_lea.sflag [#allocation3], 1
    %10 = vsyncpa %s9, 0
    loop: start=0, step=1, limit=6
    $region2: #{tpu_custom_call.1} parent=1 // loop_pre_header
      _
    $region3: #{tpu_custom_call.1} parent=1 // loop_header
      %s12 = sphi 0, %s16
      %p13 = scmp.ge.s32.totalorder %s12, 6
      %s22 = sphi 0, %s24
      %s25 = sphi 0, %s22
      %s26 = sphi 0, %s25
      %s42 = sphi 0, %s26
      %s48 = sphi 0, %s50
      %s51 = sphi 0, %s48
      %s52 = sphi 0, %s51
      %s68 = sphi 0, %s52
      %s74 = sphi 0, %s76
      %s77 = sphi 0, %s74
      %s78 = sphi 0, %s77
      %s94 = sphi 0, %s78
      %s100 = sphi 0, %s102
      %s103 = sphi 0, %s100
      %s104 = sphi 0, %s103
      %s120 = sphi 0, %s104
    $region4: #{tpu_custom_call.1} parent=1 // loop_header_branch
      %15 = sbr.rel (%p13) target = $region8
    $region5: #{tpu_custom_call.1} parent=1 // loop_body
      %s17 = ssub.s32 %s12, 1
      %s18 = ssub.s32 %s12, 2
      %s19 = sadd.s32 %s12, 1
      %s20 = ssub.s32 %s12, %s19
      %p21 = scmp.eq.s32.totalorder %s20, 0
      %s23 = sadd.s32 %s22, 1
      %s24 = scalar_select %p21, %s22, %s23
      %p27 = pneg %p21
      %p28 = scmp.eq.s32.totalorder %s12, 3
      %p29 = por %p27, %p28
      %p30 = scmp.ne.s32.totalorder %s22, %s25
      %p31 = scmp.eq.s32.totalorder %s12, 0
      %p32 = por %p30, %p31
      %p33 = scmp.ne.s32.totalorder %s22, %s25
      %p34 = scmp.eq.s32.totalorder %s17, 3
      %p35 = por %p33, %p34
      %p36 = scmp.ne.s32.totalorder %s25, %s26
      %p37 = scmp.eq.s32.totalorder %s17, 0
      %p38 = por %p36, %p37
      %p39 = scmp.ne.s32.totalorder %s25, %s26
      %p40 = scmp.eq.s32.totalorder %s18, 3
      %p41 = por %p39, %p40
      %p43 = scmp.ne.s32.totalorder %s26, %s42
      %p44 = scmp.eq.s32.totalorder %s18, 0
      %p45 = por %p43, %p44
      %s46 = ssub.s32 %s12, %s19
      %p47 = scmp.eq.s32.totalorder %s46, 0
      %s49 = sadd.s32 %s48, 1
      %s50 = scalar_select %p47, %s48, %s49
      %p53 = pneg %p47
      %p54 = scmp.eq.s32.totalorder %s12, 3
      %p55 = por %p53, %p54
      %p56 = scmp.ne.s32.totalorder %s48, %s51
      %p57 = scmp.eq.s32.totalorder %s12, 0
      %p58 = por %p56, %p57
      %p59 = scmp.ne.s32.totalorder %s48, %s51
      %p60 = scmp.eq.s32.totalorder %s17, 3
      %p61 = por %p59, %p60
      %p62 = scmp.ne.s32.totalorder %s51, %s52
      %p63 = scmp.eq.s32.totalorder %s17, 0
      %p64 = por %p62, %p63
      %p65 = scmp.ne.s32.totalorder %s51, %s52
      %p66 = scmp.eq.s32.totalorder %s18, 3
      %p67 = por %p65, %p66
      %p69 = scmp.ne.s32.totalorder %s52, %s68
      %p70 = scmp.eq.s32.totalorder %s18, 0
      %p71 = por %p69, %p70
      %s72 = ssub.s32 %s12, %s19
      %p73 = scmp.eq.s32.totalorder %s72, 0
      %s75 = sadd.s32 %s74, 1
      %s76 = scalar_select %p73, %s74, %s75
      %p79 = pneg %p73
      %p80 = scmp.eq.s32.totalorder %s12, 3
      %p81 = por %p79, %p80
      %p82 = scmp.ne.s32.totalorder %s74, %s77
      %p83 = scmp.eq.s32.totalorder %s12, 0
      %p84 = por %p82, %p83
      %p85 = scmp.ne.s32.totalorder %s74, %s77
      %p86 = scmp.eq.s32.totalorder %s17, 3
      %p87 = por %p85, %p86
      %p88 = scmp.ne.s32.totalorder %s77, %s78
      %p89 = scmp.eq.s32.totalorder %s17, 0
      %p90 = por %p88, %p89
      %p91 = scmp.ne.s32.totalorder %s77, %s78
      %p92 = scmp.eq.s32.totalorder %s18, 3
      %p93 = por %p91, %p92
      %p95 = scmp.ne.s32.totalorder %s78, %s94
      %p96 = scmp.eq.s32.totalorder %s18, 0
      %p97 = por %p95, %p96
      %s98 = ssub.s32 %s12, %s19
      %p99 = scmp.eq.s32.totalorder %s98, 0
      %s101 = sadd.s32 %s100, 1
      %s102 = scalar_select %p99, %s100, %s101
      %p105 = pneg %p99
      %p106 = scmp.eq.s32.totalorder %s12, 3
      %p107 = por %p105, %p106
      %p108 = scmp.ne.s32.totalorder %s100, %s103
      %p109 = scmp.eq.s32.totalorder %s12, 0
      %p110 = por %p108, %p109
      %p111 = scmp.ne.s32.totalorder %s100, %s103
      %p112 = scmp.eq.s32.totalorder %s17, 3
      %p113 = por %p111, %p112
      %p114 = scmp.ne.s32.totalorder %s103, %s104
      %p115 = scmp.eq.s32.totalorder %s17, 0
      %p116 = por %p114, %p115
      %p117 = scmp.ne.s32.totalorder %s103, %s104
      %p118 = scmp.eq.s32.totalorder %s18, 3
      %p119 = por %p117, %p118
      %p121 = scmp.ne.s32.totalorder %s104, %s120
      %p122 = scmp.eq.s32.totalorder %s18, 0
      %p123 = por %p121, %p122
      %p124 = scmp.le.s32.totalorder 1, %s12
      %p125 = scmp.lt.s32.totalorder %s12, 5
      %p126 = pnand %p124, %p125
      %p127 = pneg %p126
      // Predicated region
      $region9: #{tpu_custom_call.1} parent=5 // pred_check
        _
      $region10: #{tpu_custom_call.1} parent=5 // pred_check_branch
        %129 = sbr.rel (%p126) target = $region12
      $region11: #{tpu_custom_call.1} parent=5 // pred_region
        %s130 = ssub.s32 %s12, 1
      $region12: #{tpu_custom_call.1} parent=5 // pred_fallthru
        _
      %p131 = scmp.lt.s32.totalorder %s12, 4
      // Predicated region
      $region13: #{tpu_custom_call.1} parent=5 // pred_check
        %p132 = pneg %p131
      $region14: #{tpu_custom_call.1} parent=5 // pred_check_branch
        %134 = sbr.rel (%p132) target = $region16
      $region15: #{tpu_custom_call.1} parent=5 // pred_region
        // Predicated region
        $region17: #{tpu_custom_call.1} parent=15 // pred_check
          %p135 = pneg %p32
        $region18: #{tpu_custom_call.1} parent=15 // pred_check_branch
          %137 = sbr.rel (%p135) target = $region20
        $region19: #{tpu_custom_call.1} parent=15 // pred_region
          %p138 = scmp.lt.s32.totalorder %s12, 3
          %s139 = scalar_select %p138, %s12, 3
          %s140 = smul.addr %s139, 8
          %s141 = scalar_lea.vmem %s0, %s140
        $region20: #{tpu_custom_call.1} parent=15 // pred_fallthru
          _
        // Predicated region
        $region21: #{tpu_custom_call.1} parent=15 // pred_check
          %p142 = pneg %p58
        $region22: #{tpu_custom_call.1} parent=15 // pred_check_branch
          %144 = sbr.rel (%p142) target = $region24
        $region23: #{tpu_custom_call.1} parent=15 // pred_region
          %s145 = sand.u32 %s48, 1
          %s146 = scalar_lea.sflag [#allocation3], %s145
          %s147 = sand.u32 %s48, 1
          %s148 = smul.addr %s147, 8
          %s149 = scalar_lea.vmem [#allocation2], %s148
          %s151 = ssub.s32 128, 128
          %152 = vsyncadd %s146, %s151
          %s153 = smul.addr %s12, 128
          %s154 = scalar_lea.hbm %s1, %s153
          %s156 = sshll.u32 %s149, 4
          %s157 = int_to_ptr.vmem [resolvable:$true] %s156
          %159 = dma.hbm_to_vmem [thread:$0]  %s154, 128, %s157, %s146
        $region24: #{tpu_custom_call.1} parent=15 // pred_fallthru
          _
        // Predicated region
        $region25: #{tpu_custom_call.1} parent=15 // pred_check
          %p160 = pneg %p84
        $region26: #{tpu_custom_call.1} parent=15 // pred_check_branch
          %162 = sbr.rel (%p160) target = $region28
        $region27: #{tpu_custom_call.1} parent=15 // pred_region
          %p163 = scmp.lt.s32.totalorder %s12, 3
          %s164 = scalar_select %p163, %s12, 3
          %s165 = smul.addr %s164, 8
          %s166 = scalar_lea.vmem %s2, %s165
        $region28: #{tpu_custom_call.1} parent=15 // pred_fallthru
          _
      $region16: #{tpu_custom_call.1} parent=5 // pred_fallthru
        _
      %p167 = scmp.le.s32.totalorder 1, %s12
      %p168 = scmp.lt.s32.totalorder %s12, 5
      %p169 = pnand %p167, %p168
      %p170 = pneg %p169
      // Predicated region
      $region29: #{tpu_custom_call.1} parent=5 // pred_check
        _
      $region30: #{tpu_custom_call.1} parent=5 // pred_check_branch
        %172 = sbr.rel (%p169) target = $region32
      $region31: #{tpu_custom_call.1} parent=5 // pred_region
        %s173 = ssub.s32 %s12, 1
        %s174 = sand.u32 %s51, 1
        %s175 = scalar_lea.sflag [#allocation3], %s174
        %s176 = sand.u32 %s51, 1
        %s177 = smul.addr %s176, 8
        %s178 = scalar_lea.vmem [#allocation2], %s177
        // Predicated region
        $region33: #{tpu_custom_call.1} parent=31 // pred_check
          %p179 = pneg %p64
        $region34: #{tpu_custom_call.1} parent=31 // pred_check_branch
          %181 = sbr.rel (%p179) target = $region36
        $region35: #{tpu_custom_call.1} parent=31 // pred_region
          %182 = dma.done %s175, 128
        $region36: #{tpu_custom_call.1} parent=31 // pred_fallthru
          _
        %p183 = scmp.lt.s32.totalorder %s17, 3
        %s184 = scalar_select %p183, %s17, 3
        %s185 = smul.addr %s184, 8
        %s186 = scalar_lea.vmem %s0, %s185
        %p187 = pneg %p38
        %p188 = pneg %p35
        %s189 = sand.u32 %s51, 1
        %s190 = scalar_lea.sflag [#allocation3], %s189
        %s191 = sand.u32 %s51, 1
        %s192 = smul.addr %s191, 8
        %s193 = scalar_lea.vmem [#allocation2], %s192
        %p194 = pneg %p64
        %p195 = pneg %p61
        %p196 = scmp.lt.s32.totalorder %s17, 3
        %s197 = scalar_select %p196, %s17, 3
        %s198 = smul.addr %s197, 8
        %s199 = scalar_lea.vmem %s2, %s198
        %p200 = pneg %p90
        %p201 = pneg %p87
        %p202 = pneg %p116
        %p203 = pneg %p113
        %p204 = scmp.lt.s32.totalorder %s17, 3
        %s205 = scalar_select %p204, %s17, 3
        %s206 = smul.addr %s205, 8
        %s207 = scalar_lea.vmem %s3, %s206
        %p208 = scmp.lt.s32.totalorder %s17, 3
        %s209 = scalar_select %p208, %s17, 3
        %s210 = smul.addr %s209, 8
        %s211 = scalar_lea.vmem %s0, %s210
        %p212 = scmp.lt.s32.totalorder %s17, 3
        %s213 = scalar_select %p212, %s17, 3
        %s214 = smul.addr %s213, 8
        %s215 = scalar_lea.vmem %s2, %s214
        %p216 = scmp.lt.s32.totalorder %s17, 3
        %s217 = scalar_select %p216, %s17, 3
        %s218 = smul.addr %s217, 8
        %s219 = scalar_lea.vmem %s3, %s218
        %v220 = vld [vmem:[%s211] sm:$0xff]
        %v221 = vld [vmem:[%s178] sm:$0xff]
        %v222 = vld [vmem:[%s215] sm:$0xff]
        %v223 = vmul.f32 %v220, %v221
        %vm224 = vcmask 523264
        %v225 = vsel %vm224, %v223, 0.0
        %226 = vadd.xlane.f32.xlu0 %v225
        %v227 = vpop.xlane.xlu0 %226
        %v228 = vmul.f32 %v220, %v220
        %v229 = vsel %vm224, %v228, 0.0
        %230 = vadd.xlane.f32.xlu0 %v229
        %v231 = vpop.xlane.xlu0 %230
        %v232 = vmul.f32 %v221, %v221
        %v233 = vsel %vm224, %v232, 0.0
        %234 = vadd.xlane.f32.xlu0 %v233
        %v235 = vpop.xlane.xlu0 %234
        %v236 = vmul.f32 %v231, %v235
        %v237 = vmax.f32 %v236, 1e-16
        %v238 = vrsqrt.pop %v237
        %v239 = vmul.f32 %v227, %v238
        %v240 = vsub.f32 1.0, %v239
        %v241 = vsub.f32 %v239, 0.3
        %v242 = vmax.f32 %v241, 0.0
        %vm243 = vcmp.gt.s32.totalorder %v222, 0
        %v244 = vsel %vm243, %v240, %v242
        %s245 = smul.u32 %s17, 8
        %v246 = vlaneseq
        %v247 = vshrl.u32 %v246, 7
        %v248 = vstv %s245
        %v249 = vadd.s32 %v248, %v247
        %vm250 = vcmp.lt.s32.totalorder %v249, 32
        %v251 = vsel %vm250, %v244, 0.0
        %vm252 = vcmask 7168
        %253 = vst.msk [vmem:[%s219] sm:$0xff] %vm252, %v251
        %p254 = scmp.lt.s32.totalorder %s17, 3
        %s255 = scalar_select %p254, %s17, 3
        %s256 = smul.addr %s255, 8
        %s257 = scalar_lea.vmem %s3, %s256
        // Predicated region
        $region37: #{tpu_custom_call.1} parent=31 // pred_check
          %p258 = pneg %p113
        $region38: #{tpu_custom_call.1} parent=31 // pred_check_branch
          %260 = sbr.rel (%p258) target = $region40
        $region39: #{tpu_custom_call.1} parent=31 // pred_region
          _
        $region40: #{tpu_custom_call.1} parent=31 // pred_fallthru
          _
      $region32: #{tpu_custom_call.1} parent=5 // pred_fallthru
        _
      %p261 = scmp.le.s32.totalorder 2, %s12
      // Predicated region
      $region41: #{tpu_custom_call.1} parent=5 // pred_check
        %p262 = pneg %p261
      $region42: #{tpu_custom_call.1} parent=5 // pred_check_branch
        %264 = sbr.rel (%p262) target = $region44
      $region43: #{tpu_custom_call.1} parent=5 // pred_region
        %s265 = ssub.s32 %s12, 2
        // Predicated region
        $region45: #{tpu_custom_call.1} parent=43 // pred_check
          %p266 = pneg %p119
        $region46: #{tpu_custom_call.1} parent=43 // pred_check_branch
          %268 = sbr.rel (%p266) target = $region48
        $region47: #{tpu_custom_call.1} parent=43 // pred_region
          %p269 = scmp.lt.s32.totalorder %s18, 3
          %s270 = scalar_select %p269, %s18, 3
          %s271 = smul.addr %s270, 8
          %s272 = scalar_lea.vmem %s3, %s271
        $region48: #{tpu_custom_call.1} parent=43 // pred_fallthru
          _
      $region44: #{tpu_custom_call.1} parent=5 // pred_fallthru
        _
    $region6: #{tpu_custom_call.1} parent=1 // loop_footer
      %s16 = sadd.s32 1, %s12
    $region7: #{tpu_custom_call.1} parent=1 // loop_footer_branch
      %11 = sbr.rel target = $region3
    $region8: #{tpu_custom_call.1} parent=1 // loop_exit
      _
    %273 = vsyncpa [#allocation3], 1
    %s274 = scalar_lea.sflag [#allocation3], 1
    %275 = vsyncpa %s274, 1

</llo_original>
